<compile_context>
chip_gen: v5e
topology: v5e:2x2
jax: 0.10.0
libtpu: 0.0.40
codegen_flags: <defaults>
</compile_context>

<pallas_src>
import jax
import jax.numpy as jnp
from jax.experimental import pallas as pl
from jax.experimental.pallas import tpu as pltpu


def _round_up(x, m):
    return ((x + m - 1) // m) * m


def subnet_kernel(x_ref, w1_ref, b1_ref, w2_ref, b2_ref, o_ref):
    # x_ref : (tb, D) f32        w1_ref: (D, H) f32   b1_ref: (1, H) f32
    # w2_ref: (H, K)  f32        b2_ref: (1, K) f32   o_ref : (tb, K) f32
    # fc1: (tb, D) @ (D, H) -> (tb, H), f32 accumulation on the MXU
    h = jnp.dot(x_ref[...], w1_ref[...], preferred_element_type=jnp.float32)
    h = jnp.maximum(h + b1_ref[...], 0.0)                      # bias + ReLU (VPU)
    # fc2: (tb, H) @ (H, K) -> (tb, K)
    y = jnp.dot(h, w2_ref[...], preferred_element_type=jnp.float32) + b2_ref[...]
    # exact sigmoid(y) * 3 + 1 (exp/recip land on the otherwise-idle EUP)
    sig = 1.0 / (1.0 + jnp.exp(-y))
    o_ref[...] = (3.0 * sig + 1.0).astype(o_ref.dtype)


def subnet_forward(x, w1, b1, w2, b2, *, tile_b=16384):
    """x: (B, D) f32; w1: (D, H); b1: (H,); w2: (H, K); b2: (K,). Returns (B, K) f32."""
    B, D = x.shape
    H = w1.shape[1]
    K = w2.shape[1]
    assert w1.shape == (D, H) and w2.shape == (H, K)
    assert b1.shape == (H,) and b2.shape == (K,)

    # Pad batch only to the 8-row sublane granule (zero-filled, tiny copy at most).
    b_pad = _round_up(B, 8)
    x_p = jnp.pad(x, ((0, b_pad - B), (0, 0))) if b_pad != B else x

    # Batch tile: large enough to amortize the ~0.35 us per-grid-step overhead,
    # but capped so large B still yields >=4 grid steps (keeps both v7x TCs busy).
    tb = min(tile_b, _round_up(pl.cdiv(b_pad, 4), 128))
    tb = max(8, min(tb, b_pad))          # multiple of 8 by construction
    grid = (pl.cdiv(b_pad, tb),)         # ragged last tile handled by Pallas

    b1c = b1.reshape(1, H).astype(jnp.float32)
    b2c = b2.reshape(1, K).astype(jnp.float32)

    out = pl.pallas_call(
        subnet_kernel,
        out_shape=jax.ShapeDtypeStruct((b_pad, K), jnp.float32),
        grid=grid,
        in_specs=[
            pl.BlockSpec((tb, D), lambda i: (i, 0)),   # x streams over batch, natural layout
            pl.BlockSpec((D, H), lambda i: (0, 0)),    # weights/biases: VMEM-resident
            pl.BlockSpec((1, H), lambda i: (0, 0)),
            pl.BlockSpec((H, K), lambda i: (0, 0)),
            pl.BlockSpec((1, K), lambda i: (0, 0)),
        ],
        out_specs=pl.BlockSpec((tb, K), lambda i: (i, 0)),
        compiler_params=pltpu.CompilerParams(
            dimension_semantics=("parallel",),   # shard batch tiles across v7x TCs
        ),
    )(x_p, w1.astype(jnp.float32), b1c, w2.astype(jnp.float32), b2c)

    return out if b_pad == B else out[:B]


def reference_forward_f32(x, w1, b1, w2, b2):
    h = jnp.maximum(x @ w1 + b1, 0.0)
    y = h @ w2 + b2
    return jax.nn.sigmoid(y) * 3.0 + 1.0


def _make_params(key, inputdim, hidden, numberkernel):
    kw1, kb1, kw2, kb2 = jax.random.split(key, 4)
    lim1 = 1.0 / (inputdim ** 0.5)
    w1 = jax.random.uniform(kw1, (inputdim, hidden), jnp.float32, -lim1, lim1)
    b1 = jax.random.uniform(kb1, (hidden,), jnp.float32, -lim1, lim1)
    lim2 = 1.0 / (hidden ** 0.5)
    w2 = jax.random.uniform(kw2, (hidden, numberkernel), jnp.float32, -lim2, lim2)
    b2 = jax.random.uniform(kb2, (numberkernel,), jnp.float32, -lim2, lim2)
    return w1, b1, w2, b2


if __name__ == "__main__":
    # SubNet(numberkernel=4, inputdim=32); hidden=16 fixed by the module.
    numberkernel = 4
    inputdim = 32
    hidden = 16

    key = jax.random.PRNGKey(0)
    kparam, kx_small, kx_big = jax.random.split(key, 3)
    w1, b1, w2, b2 = _make_params(kparam, inputdim, hidden, numberkernel)

    # Case 1: small batch (module-scale smoke test) -- single grid step.
    batch = 8
    x = jax.random.normal(kx_small, (batch, inputdim), dtype=jnp.float32)
    out = jax.block_until_ready(subnet_forward(x, w1, b1, w2, b2))
    assert out.shape == (batch, numberkernel)
    ref = reference_forward_f32(x, w1, b1, w2, b2)
    assert bool(jnp.all(jnp.isfinite(out)))
    assert bool(jnp.all((out >= 1.0) & (out <= 4.0)))
    assert jnp.allclose(out, ref, atol=2e-2, rtol=0.0)

    # Case 2: larger batch exercising the multi-step, megacore-parallel grid
    # (tb = 1024 -> 4 grid steps).
    batch_big = 4096
    xb = jax.random.normal(kx_big, (batch_big, inputdim), dtype=jnp.float32)
    out_big = jax.block_until_ready(subnet_forward(xb, w1, b1, w2, b2))
    assert out_big.shape == (batch_big, numberkernel)
    ref_big = reference_forward_f32(xb, w1, b1, w2, b2)
    assert bool(jnp.all(jnp.isfinite(out_big)))
    assert jnp.allclose(out_big, ref_big, atol=2e-2, rtol=0.0)

    print("KERNEL_OK")
</pallas_src>

<mosaic_0001>
module attributes {stable_mosaic.version = 11 : i64} {
  func.func @subnet_kernel(%arg0: i32, %arg1: memref<8x32xf32, #tpu.memory_space<vmem>>, %arg2: memref<32x16xf32, #tpu.memory_space<vmem>>, %arg3: memref<1x16xf32, #tpu.memory_space<vmem>>, %arg4: memref<16x4xf32, #tpu.memory_space<vmem>>, %arg5: memref<1x4xf32, #tpu.memory_space<vmem>>, %arg6: memref<8x4xf32, #tpu.memory_space<vmem>>) attributes {dimension_semantics = [#tpu.dimension_semantics<parallel>], iteration_bounds = array<i64: 1>, scalar_prefetch = 0 : i64, scratch_operands = 0 : i64, tpu.core_type = #tpu.core_type<tc>, window_params = [{transform_indices = @transform_0, window_bounds = array<i64: 8, 32>}, {pipeline_mode = #tpu.pipeline_mode<synchronous>, transform_indices = @transform_1, window_bounds = array<i64: 32, 16>}, {pipeline_mode = #tpu.pipeline_mode<synchronous>, transform_indices = @transform_2, window_bounds = array<i64: 1, 16>}, {pipeline_mode = #tpu.pipeline_mode<synchronous>, transform_indices = @transform_3, window_bounds = array<i64: 16, 4>}, {pipeline_mode = #tpu.pipeline_mode<synchronous>, transform_indices = @transform_4, window_bounds = array<i64: 1, 4>}, {transform_indices = @transform_5, window_bounds = array<i64: 8, 4>}]} {
    %c0 = arith.constant 0 : index
    %c0_0 = arith.constant 0 : index
    %0 = vector.load %arg1[%c0, %c0_0] : memref<8x32xf32, #tpu.memory_space<vmem>>, vector<8x32xf32>
    %c0_1 = arith.constant 0 : index
    %c0_2 = arith.constant 0 : index
    %1 = vector.load %arg2[%c0_1, %c0_2] : memref<32x16xf32, #tpu.memory_space<vmem>>, vector<32x16xf32>
    %cst = arith.constant dense<0.000000e+00> : vector<8x16xf32>
    %2 = tpu.matmul %0, %1, %cst {dimension_numbers = #tpu.dot_dimension_numbers<[1], [0], [0], [1], [0, 0, 1, 1], [], []>} : vector<8x32xf32>, vector<32x16xf32>, vector<8x16xf32> -> vector<8x16xf32>
    %c0_3 = arith.constant 0 : index
    %c0_4 = arith.constant 0 : index
    %3 = vector.load %arg3[%c0_3, %c0_4] : memref<1x16xf32, #tpu.memory_space<vmem>>, vector<1x16xf32>
    %4 = vector.broadcast %3 : vector<1x16xf32> to vector<8x16xf32>
    %5 = arith.addf %2, %4 : vector<8x16xf32>
    %cst_5 = arith.constant 0.000000e+00 : f32
    %6 = vector.broadcast %cst_5 : f32 to vector<8x16xf32>
    %7 = arith.maximumf %5, %6 : vector<8x16xf32>
    %c0_6 = arith.constant 0 : index
    %c0_7 = arith.constant 0 : index
    %8 = vector.load %arg4[%c0_6, %c0_7] : memref<16x4xf32, #tpu.memory_space<vmem>>, vector<16x4xf32>
    %cst_8 = arith.constant dense<0.000000e+00> : vector<8x4xf32>
    %9 = tpu.matmul %7, %8, %cst_8 {dimension_numbers = #tpu.dot_dimension_numbers<[1], [0], [0], [1], [0, 0, 1, 1], [], []>} : vector<8x16xf32>, vector<16x4xf32>, vector<8x4xf32> -> vector<8x4xf32>
    %c0_9 = arith.constant 0 : index
    %c0_10 = arith.constant 0 : index
    %10 = vector.load %arg5[%c0_9, %c0_10] : memref<1x4xf32, #tpu.memory_space<vmem>>, vector<1x4xf32>
    %11 = vector.broadcast %10 : vector<1x4xf32> to vector<8x4xf32>
    %12 = arith.addf %9, %11 : vector<8x4xf32>
    %cst_11 = arith.constant 0.000000e+00 : f32
    %13 = vector.broadcast %cst_11 : f32 to vector<8x4xf32>
    %14 = arith.subf %13, %12 : vector<8x4xf32>
    %15 = math.exp %14 : vector<8x4xf32>
    %cst_12 = arith.constant 1.000000e+00 : f32
    %16 = vector.broadcast %cst_12 : f32 to vector<8x4xf32>
    %17 = arith.addf %16, %15 : vector<8x4xf32>
    %cst_13 = arith.constant 1.000000e+00 : f32
    %18 = vector.broadcast %cst_13 : f32 to vector<8x4xf32>
    %19 = arith.divf %18, %17 : vector<8x4xf32>
    %cst_14 = arith.constant 3.000000e+00 : f32
    %20 = vector.broadcast %cst_14 : f32 to vector<8x4xf32>
    %21 = arith.mulf %20, %19 : vector<8x4xf32>
    %cst_15 = arith.constant 1.000000e+00 : f32
    %22 = vector.broadcast %cst_15 : f32 to vector<8x4xf32>
    %23 = arith.addf %21, %22 : vector<8x4xf32>
    %c0_16 = arith.constant 0 : index
    %c0_17 = arith.constant 0 : index
    %24 = vector.load %arg6[%c0_16, %c0_17] : memref<8x4xf32, #tpu.memory_space<vmem>>, vector<8x4xf32>
    tpu.vector_store %arg6[%c0_16, %c0_17], %23 {strides = array<i32>} : memref<8x4xf32, #tpu.memory_space<vmem>>, vector<8x4xf32>,
    return
  }
  func.func @transform_0(%arg0: i32) -> (i32, i32) {
    %c0_i32 = arith.constant 0 : i32
    %c0_i32_0 = arith.constant 0 : i32
    return %arg0, %c0_i32 : i32, i32
  }
  func.func @transform_1(%arg0: i32) -> (i32, i32) {
    %c0_i32 = arith.constant 0 : i32
    %c0_i32_0 = arith.constant 0 : i32
    %c0_i32_1 = arith.constant 0 : i32
    return %c0_i32, %c0_i32_0 : i32, i32
  }
  func.func @transform_2(%arg0: i32) -> (i32, i32) {
    %c0_i32 = arith.constant 0 : i32
    %c0_i32_0 = arith.constant 0 : i32
    %c0_i32_1 = arith.constant 0 : i32
    return %c0_i32, %c0_i32_0 : i32, i32
  }
  func.func @transform_3(%arg0: i32) -> (i32, i32) {
    %c0_i32 = arith.constant 0 : i32
    %c0_i32_0 = arith.constant 0 : i32
    %c0_i32_1 = arith.constant 0 : i32
    return %c0_i32, %c0_i32_0 : i32, i32
  }
  func.func @transform_4(%arg0: i32) -> (i32, i32) {
    %c0_i32 = arith.constant 0 : i32
    %c0_i32_0 = arith.constant 0 : i32
    %c0_i32_1 = arith.constant 0 : i32
    return %c0_i32, %c0_i32_0 : i32, i32
  }
  func.func @transform_5(%arg0: i32) -> (i32, i32) {
    %c0_i32 = arith.constant 0 : i32
    %c0_i32_0 = arith.constant 0 : i32
    return %arg0, %c0_i32 : i32, i32
  }
}

</mosaic_0001>

<llo_original>
// kernel: tpu_custom_call.1
$region0: #{tpu_custom_call.1}
  #allocation0 [shape = 'u32[]', space=smem, size = 0x4, offset = 0x4, fixed_abs, tag = 'smem constant byte address 0x4 - core index']
  #allocation1 [shape = 'u32[72,128]{1,0:T(1,128)}', space=vmem, size = 0x9000, scoped, tag = 'internal scratch']
  %s0 = inlined_call_operand.vmem [shape: f32[8,32], index: 0, kind: input, shape index: {}]
  %s1 = inlined_call_operand.vmem [shape: f32[32,16], index: 1, kind: input, shape index: {}]
  %s2 = inlined_call_operand.vmem [shape: f32[1,16], index: 2, kind: input, shape index: {}]
  %s3 = inlined_call_operand.vmem [shape: f32[16,4], index: 3, kind: input, shape index: {}]
  %s4 = inlined_call_operand.vmem [shape: f32[1,4], index: 4, kind: input, shape index: {}]
  %s5 = inlined_call_operand.vmem [shape: f32[8,4], index: 5, kind: output, shape index: {}]
  %s6 = sld [smem:[#allocation0]]
  $region30: #{tpu_custom_call.1} parent=0
    _
  %s8 = ssub.s32 1, %s6
  %s9 = scalar_select 0, %s8, %s6
  // Predicated region
  $region2: #{tpu_custom_call.1} parent=0 // pred_check
    _
  $region3: #{tpu_custom_call.1} parent=0 // pred_check_branch
    %11 = sbr.rel (0) target = $region5
  $region4: #{tpu_custom_call.1} parent=0 // pred_region
    _
  $region5: #{tpu_custom_call.1} parent=0 // pred_fallthru
    _
  // Predicated region
  $region6: #{tpu_custom_call.1} parent=0 // pred_check
    _
  $region7: #{tpu_custom_call.1} parent=0 // pred_check_branch
    %13 = sbr.rel (0) target = $region9
  $region8: #{tpu_custom_call.1} parent=0 // pred_region
    _
  $region9: #{tpu_custom_call.1} parent=0 // pred_fallthru
    _
  // Predicated region
  $region10: #{tpu_custom_call.1} parent=0 // pred_check
    _
  $region11: #{tpu_custom_call.1} parent=0 // pred_check_branch
    %15 = sbr.rel (0) target = $region13
  $region12: #{tpu_custom_call.1} parent=0 // pred_region
    _
  $region13: #{tpu_custom_call.1} parent=0 // pred_fallthru
    _
  // Predicated region
  $region14: #{tpu_custom_call.1} parent=0 // pred_check
    _
  $region15: #{tpu_custom_call.1} parent=0 // pred_check_branch
    %17 = sbr.rel (0) target = $region17
  $region16: #{tpu_custom_call.1} parent=0 // pred_region
    _
  $region17: #{tpu_custom_call.1} parent=0 // pred_fallthru
    _
  // Predicated region
  $region18: #{tpu_custom_call.1} parent=0 // pred_check
    _
  $region19: #{tpu_custom_call.1} parent=0 // pred_check_branch
    %19 = sbr.rel (0) target = $region21
  $region20: #{tpu_custom_call.1} parent=0 // pred_region
    _
  $region21: #{tpu_custom_call.1} parent=0 // pred_fallthru
    _
  %v20 = vld [vmem:[%s0] sm:$0xff]
  %v21 = vld [vmem:[%s1] sm:$0xff]
  %v22 = vld [vmem:[%s1 + $0x8] sm:$0xff]
  %v23 = vld [vmem:[%s1 + $0x10] sm:$0xff]
  %v24 = vld [vmem:[%s1 + $0x18] sm:$0xff]
  %v25 = vld [vmem:[%s2] sm:$0x1]
  %v27 = vperm.slane %v25, 0
  %vm29 = vcmask 261120
  %v31 = vsel %vm29, %v20, 0
  %33 = vmatpush.msra.mxu0 0.0
  %34 = vmatpush.msra.mxu0 0.0
  %35 = vmatpush.msra.mxu0 0.0
  %36 = vmatpush.msra.mxu0 0.0
  %37 = vmatpush.msra.mxu0 0.0
  %38 = vmatpush.msra.mxu0 0.0
  %39 = vmatpush.msra.mxu0 0.0
  %40 = vmatpush.msra.mxu0 0.0
  %41 = vmatpush.msra.mxu0 0.0
  %42 = vmatpush.msra.mxu0 0.0
  %43 = vmatpush.msra.mxu0 0.0
  %44 = vmatpush.msra.mxu0 0.0
  %45 = vmatpush.msra.mxu0 %v24
  %46 = vmatpush.msra.mxu0 %v23
  %47 = vmatpush.msra.mxu0 %v22
  %48 = vmatpush.msra.mxu0 %v21
  %49 = vmatmul.f32.gmra.mxu0 %v31
  %v50 = vpop.f32.mrf.mxu0
  %v51 = vadd.f32 %v27, %v50
  %52 = vdwg.mxu0
  %v53 = vmax.f32 %v51, 0.0
  %v54 = vld [vmem:[%s3] sm:$0xff]
  %v55 = vld [vmem:[%s3 + $0x8] sm:$0xff]
  %v56 = vld [vmem:[%s4] sm:$0x1]
  %v58 = vperm.slane %v56, 0
  %vm60 = vcmask 130048
  %v62 = vsel %vm60, %v53, 0
  %64 = vmatpush.msra.mxu0 0.0
  %65 = vmatpush.msra.mxu0 0.0
  %66 = vmatpush.msra.mxu0 0.0
  %67 = vmatpush.msra.mxu0 0.0
  %68 = vmatpush.msra.mxu0 0.0
  %69 = vmatpush.msra.mxu0 0.0
  %70 = vmatpush.msra.mxu0 0.0
  %71 = vmatpush.msra.mxu0 0.0
  %72 = vmatpush.msra.mxu0 0.0
  %73 = vmatpush.msra.mxu0 0.0
  %74 = vmatpush.msra.mxu0 0.0
  %75 = vmatpush.msra.mxu0 0.0
  %76 = vmatpush.msra.mxu0 0.0
  %77 = vmatpush.msra.mxu0 0.0
  %78 = vmatpush.msra.mxu0 %v55
  %79 = vmatpush.msra.mxu0 %v54
  %80 = vmatmul.f32.gmra.mxu0 %v62
  %v81 = vpop.f32.mrf.mxu0
  %v82 = vadd.f32 %v58, %v81
  %83 = vdwg.mxu0
  %v84 = vsub.f32 0.0, %v82
  %v85 = vmul.f32 %v84, 1.442695
  %v86 = vpow.pop %v85
  %v87 = vadd.f32 %v86, 1.0
  %v88 = vrcp.pop %v87
  %v89 = vmul.f32 %v87, %v88
  %v90 = vsub.f32 1.0, %v89
  %v91 = vmul.f32 %v88, %v90
  %v92 = vadd.f32 %v88, %v91
  %vm93 = vweird.f32 %v87
  %vm94 = vweird.f32 %v88
  %vm95 = vmor %vm93, %vm94
  %v96 = vsel %vm95, %v88, %v92
  %v97 = vand.u32 2147483647, %v87
  %vm98 = vcmp.eq.f32.partialorder %v97, 8.507059e+37
  %v99 = vand.u32 %v87, 2147483648
  %v100 = vor.u32 1.1754944e-38, %v99
  %v101 = vsel %vm98, %v100, %v96
  %v102 = vmul.f32 1.0, %v101
  %v103 = vmul.f32 %v102, 3.0
  %v104 = vadd.f32 %v103, 1.0
  %vm105 = vcmask 31744
  %106 = vst.msk [vmem:[%s5] sm:$0xff] %vm105, %v104
  // Predicated region
  $region22: #{tpu_custom_call.1} parent=0 // pred_check
    _
  $region23: #{tpu_custom_call.1} parent=0 // pred_check_branch
    %108 = sbr.rel (0) target = $region25
  $region24: #{tpu_custom_call.1} parent=0 // pred_region
    _
  $region25: #{tpu_custom_call.1} parent=0 // pred_fallthru
    _
  // Predicated region
  $region26: #{tpu_custom_call.1} parent=0 // pred_check
    _
  $region27: #{tpu_custom_call.1} parent=0 // pred_check_branch
    %110 = sbr.rel (0) target = $region29
  $region28: #{tpu_custom_call.1} parent=0 // pred_region
    _
  $region29: #{tpu_custom_call.1} parent=0 // pred_fallthru
    _

</llo_original>
